<compile_context>
chip_gen: v7x
topology: tpu7x:2x2x1
jax: 0.10.0
libtpu: 0.0.40
codegen_flags: <defaults>
</compile_context>

<pallas_src>
import jax
import jax.numpy as jnp
from jax.experimental import pallas as pl
from jax.experimental.pallas import tpu as pltpu

BN_EPS = 1e-5
LRELU_SLOPE = 0.2
LANE = 128
SUBLANE = 8


def _round_up(x, m):
    return ((x + m - 1) // m) * m


# ----------------------------------------------------------------------------
# Fused decoder kernel: all layers chained in a single kernel body.
# refs layout: x, w_0 ... w_{L-1}, b_packed, out
# ----------------------------------------------------------------------------
def _make_decoder_kernel(n_layers):
    def kernel(*refs):
        x_ref = refs[0]
        w_refs = refs[1:1 + n_layers]
        b_ref = refs[1 + n_layers]
        o_ref = refs[2 + n_layers]

        h = x_ref[...]
        for l in range(n_layers):
            w = w_refs[l][...]
            n_pad = w.shape[1]
            b = b_ref[l:l + 1, :n_pad]                      # (1, n_pad)
            h = jnp.dot(h.astype(w.dtype), w,
                        preferred_element_type=jnp.float32) + b
            if l < n_layers - 1:
                # hidden layers: LeakyReLU(0.2); BN already folded into W/b.
                h = jnp.where(h > 0, h, LRELU_SLOPE * h)
            # TODO(synk): Dropout(p=0.1) omitted -- identity in eval mode.
        o_ref[...] = h
    return kernel


# ----------------------------------------------------------------------------
# Parameter prep: fold BN (running stats), pad to 128-lane multiples, pack bias.
# ----------------------------------------------------------------------------
def fold_and_pad_params(params, *, use_bf16=False):
    weights, biases = [], []
    for (w, b, gamma, beta, mean, var) in params["hidden"]:
        scale = gamma * jax.lax.rsqrt(var + BN_EPS)          # (1, N)
        weights.append(w * scale)                            # (K, N)
        biases.append((b - mean) * scale + beta)             # (1, N)
    w, b = params["final"]
    weights.append(w)
    biases.append(b)

    padded_w = []
    for w in weights:
        K, N = w.shape
        kp, np_ = _round_up(K, LANE), _round_up(N, LANE)
        wp = jnp.pad(w, ((0, kp - K), (0, np_ - N)))
        if use_bf16:
            wp = wp.astype(jnp.bfloat16)
        padded_w.append(wp)

    np_max = max(w.shape[1] for w in padded_w)
    b_packed = jnp.zeros((len(weights), np_max), jnp.float32)
    for l, b in enumerate(biases):
        b_packed = b_packed.at[l, :b.shape[1]].set(b[0])
    return padded_w, b_packed


# ----------------------------------------------------------------------------
# Single-pallas_call decoder forward.
# ----------------------------------------------------------------------------
def decoder_apply(padded_w, b_packed, x, out_dim, *, batch_tile=128,
                  use_bf16=False):
    B, K = x.shape
    kp0 = padded_w[0].shape[0]
    np_out = padded_w[-1].shape[1]
    n_layers = len(padded_w)

    # Batch tiling: grid over batch, weights resident across grid steps.
    tb = min(batch_tile, _round_up(B, SUBLANE))
    bp = _round_up(B, tb)
    x_p = jnp.pad(x, ((0, bp - B), (0, kp0 - K)))
    if use_bf16:
        x_p = x_p.astype(jnp.bfloat16)

    in_specs = [pl.BlockSpec((tb, kp0), lambda i: (i, 0))]
    for w in padded_w:
        in_specs.append(pl.BlockSpec(w.shape, lambda i: (0, 0)))
    in_specs.append(pl.BlockSpec(b_packed.shape, lambda i: (0, 0)))

    out = pl.pallas_call(
        _make_decoder_kernel(n_layers),
        out_shape=jax.ShapeDtypeStruct((bp, np_out), jnp.float32),
        grid=(bp // tb,),
        in_specs=in_specs,
        out_specs=pl.BlockSpec((tb, np_out), lambda i: (i, 0)),
        compiler_params=pltpu.CompilerParams(
            dimension_semantics=("parallel",)),
    )(x_p, *padded_w, b_packed)

    return out[:B, :out_dim]


# ----------------------------------------------------------------------------
# Synthetic parameters matching the PyTorch module's shapes (weights stored
# as (in, out) so the kernel computes x @ W).
# ----------------------------------------------------------------------------
def init_decoder_params(key, latent_dim, hidden_dims, output_dim):
    hidden_dims = hidden_dims[::-1]                # module reverses hidden_dims
    params = {"hidden": [], "final": None}
    in_features = latent_dim
    for h in hidden_dims:
        key, kw, kb, kg, kbe, km, kv = jax.random.split(key, 7)
        w = jax.random.normal(kw, (in_features, h), jnp.float32) / jnp.sqrt(in_features)
        b = 0.01 * jax.random.normal(kb, (1, h), jnp.float32)
        gamma = 1.0 + 0.1 * jax.random.normal(kg, (1, h), jnp.float32)
        beta = 0.1 * jax.random.normal(kbe, (1, h), jnp.float32)
        running_mean = 0.1 * jax.random.normal(km, (1, h), jnp.float32)
        running_var = 0.5 + jax.random.uniform(kv, (1, h), jnp.float32)
        params["hidden"].append((w, b, gamma, beta, running_mean, running_var))
        in_features = h
    key, kw, kb = jax.random.split(key, 3)
    w = jax.random.normal(kw, (in_features, output_dim), jnp.float32) / jnp.sqrt(in_features)
    b = 0.01 * jax.random.normal(kb, (1, output_dim), jnp.float32)
    params["final"] = (w, b)
    return params


def decoder_reference(params, x):
    """Pure-JAX eval-mode reference (unfolded BN) for correctness checking."""
    h = x
    for (w, b, gamma, beta, mean, var) in params["hidden"]:
        h = h @ w + b
        h = (h - mean) * jax.lax.rsqrt(var + BN_EPS) * gamma + beta
        h = jnp.where(h > 0, h, LRELU_SLOPE * h)
    w, b = params["final"]
    return h @ w + b


if __name__ == "__main__":
    latent_dim = 32
    hidden_dims = [64, 48]
    output_dim = 16
    batch = 8

    key = jax.random.PRNGKey(0)
    key, kx = jax.random.split(key)
    x = jax.random.normal(kx, (batch, latent_dim), jnp.float32)
    params = init_decoder_params(key, latent_dim, hidden_dims, output_dim)

    padded_w, b_packed = fold_and_pad_params(params)
    out = decoder_apply(padded_w, b_packed, x, output_dim)
    out = jax.block_until_ready(out)

    assert out.shape == (batch, output_dim), out.shape
    assert bool(jnp.all(jnp.isfinite(out)))

    ref = decoder_reference(params, x)
    max_err = float(jnp.max(jnp.abs(out - ref)))
    assert bool(jnp.allclose(out, ref, rtol=1e-3, atol=1e-3)), max_err

    print("KERNEL_OK")
</pallas_src>

<mosaic_0001>
module attributes {stable_mosaic.version = 11 : i64} {
  func.func @kernel(%arg0: i32, %arg1: memref<8x128xf32, #tpu.memory_space<vmem>>, %arg2: memref<128x128xf32, #tpu.memory_space<vmem>>, %arg3: memref<128x128xf32, #tpu.memory_space<vmem>>, %arg4: memref<128x128xf32, #tpu.memory_space<vmem>>, %arg5: memref<3x128xf32, #tpu.memory_space<vmem>>, %arg6: memref<8x128xf32, #tpu.memory_space<vmem>>) attributes {dimension_semantics = [#tpu.dimension_semantics<parallel>], iteration_bounds = array<i64: 1>, scalar_prefetch = 0 : i64, scratch_operands = 0 : i64, tpu.core_type = #tpu.core_type<tc>, window_params = [{transform_indices = @transform_0, window_bounds = array<i64: 8, 128>}, {pipeline_mode = #tpu.pipeline_mode<synchronous>, transform_indices = @transform_1, window_bounds = array<i64: 128, 128>}, {pipeline_mode = #tpu.pipeline_mode<synchronous>, transform_indices = @transform_2, window_bounds = array<i64: 128, 128>}, {pipeline_mode = #tpu.pipeline_mode<synchronous>, transform_indices = @transform_3, window_bounds = array<i64: 128, 128>}, {pipeline_mode = #tpu.pipeline_mode<synchronous>, transform_indices = @transform_4, window_bounds = array<i64: 3, 128>}, {transform_indices = @transform_5, window_bounds = array<i64: 8, 128>}]} {
    %c0 = arith.constant 0 : index
    %c0_0 = arith.constant 0 : index
    %0 = vector.load %arg1[%c0, %c0_0] : memref<8x128xf32, #tpu.memory_space<vmem>>, vector<8x128xf32>
    %c0_1 = arith.constant 0 : index
    %c0_2 = arith.constant 0 : index
    %1 = vector.load %arg2[%c0_1, %c0_2] : memref<128x128xf32, #tpu.memory_space<vmem>>, vector<128x128xf32>
    %c0_3 = arith.constant 0 : index
    %c0_4 = arith.constant 0 : index
    %2 = vector.load %arg5[%c0_3, %c0_4] : memref<3x128xf32, #tpu.memory_space<vmem>>, vector<1x128xf32>
    %cst = arith.constant dense<0.000000e+00> : vector<8x128xf32>
    %3 = tpu.matmul %0, %1, %cst {dimension_numbers = #tpu.dot_dimension_numbers<[1], [0], [0], [1], [0, 0, 1, 1], [], []>} : vector<8x128xf32>, vector<128x128xf32>, vector<8x128xf32> -> vector<8x128xf32>
    %4 = vector.broadcast %2 : vector<1x128xf32> to vector<8x128xf32>
    %5 = arith.addf %3, %4 : vector<8x128xf32>
    %cst_5 = arith.constant 0.000000e+00 : f32
    %6 = vector.broadcast %cst_5 : f32 to vector<8x128xf32>
    %7 = arith.cmpf ogt, %5, %6 : vector<8x128xf32>
    %cst_6 = arith.constant 2.000000e-01 : f32
    %8 = vector.broadcast %cst_6 : f32 to vector<8x128xf32>
    %9 = arith.mulf %8, %5 : vector<8x128xf32>
    %10 = arith.select %7, %5, %9 : vector<8x128xi1>, vector<8x128xf32>
    %c0_7 = arith.constant 0 : index
    %c0_8 = arith.constant 0 : index
    %11 = vector.load %arg3[%c0_7, %c0_8] : memref<128x128xf32, #tpu.memory_space<vmem>>, vector<128x128xf32>
    %c1 = arith.constant 1 : index
    %c0_9 = arith.constant 0 : index
    %12 = vector.load %arg5[%c1, %c0_9] : memref<3x128xf32, #tpu.memory_space<vmem>>, vector<1x128xf32>
    %cst_10 = arith.constant dense<0.000000e+00> : vector<8x128xf32>
    %13 = tpu.matmul %10, %11, %cst_10 {dimension_numbers = #tpu.dot_dimension_numbers<[1], [0], [0], [1], [0, 0, 1, 1], [], []>} : vector<8x128xf32>, vector<128x128xf32>, vector<8x128xf32> -> vector<8x128xf32>
    %14 = vector.broadcast %12 : vector<1x128xf32> to vector<8x128xf32>
    %15 = arith.addf %13, %14 : vector<8x128xf32>
    %cst_11 = arith.constant 0.000000e+00 : f32
    %16 = vector.broadcast %cst_11 : f32 to vector<8x128xf32>
    %17 = arith.cmpf ogt, %15, %16 : vector<8x128xf32>
    %cst_12 = arith.constant 2.000000e-01 : f32
    %18 = vector.broadcast %cst_12 : f32 to vector<8x128xf32>
    %19 = arith.mulf %18, %15 : vector<8x128xf32>
    %20 = arith.select %17, %15, %19 : vector<8x128xi1>, vector<8x128xf32>
    %c0_13 = arith.constant 0 : index
    %c0_14 = arith.constant 0 : index
    %21 = vector.load %arg4[%c0_13, %c0_14] : memref<128x128xf32, #tpu.memory_space<vmem>>, vector<128x128xf32>
    %c2 = arith.constant 2 : index
    %c0_15 = arith.constant 0 : index
    %22 = vector.load %arg5[%c2, %c0_15] : memref<3x128xf32, #tpu.memory_space<vmem>>, vector<1x128xf32>
    %cst_16 = arith.constant dense<0.000000e+00> : vector<8x128xf32>
    %23 = tpu.matmul %20, %21, %cst_16 {dimension_numbers = #tpu.dot_dimension_numbers<[1], [0], [0], [1], [0, 0, 1, 1], [], []>} : vector<8x128xf32>, vector<128x128xf32>, vector<8x128xf32> -> vector<8x128xf32>
    %24 = vector.broadcast %22 : vector<1x128xf32> to vector<8x128xf32>
    %25 = arith.addf %23, %24 : vector<8x128xf32>
    %c0_17 = arith.constant 0 : index
    %c0_18 = arith.constant 0 : index
    %26 = vector.load %arg6[%c0_17, %c0_18] : memref<8x128xf32, #tpu.memory_space<vmem>>, vector<8x128xf32>
    tpu.vector_store %arg6[%c0_17, %c0_18], %25 {strides = array<i32>} : memref<8x128xf32, #tpu.memory_space<vmem>>, vector<8x128xf32>,
    return
  }
  func.func @transform_0(%arg0: i32) -> (i32, i32) {
    %c0_i32 = arith.constant 0 : i32
    %c0_i32_0 = arith.constant 0 : i32
    return %arg0, %c0_i32 : i32, i32
  }
  func.func @transform_1(%arg0: i32) -> (i32, i32) {
    %c0_i32 = arith.constant 0 : i32
    %c0_i32_0 = arith.constant 0 : i32
    %c0_i32_1 = arith.constant 0 : i32
    return %c0_i32, %c0_i32_0 : i32, i32
  }
  func.func @transform_2(%arg0: i32) -> (i32, i32) {
    %c0_i32 = arith.constant 0 : i32
    %c0_i32_0 = arith.constant 0 : i32
    %c0_i32_1 = arith.constant 0 : i32
    return %c0_i32, %c0_i32_0 : i32, i32
  }
  func.func @transform_3(%arg0: i32) -> (i32, i32) {
    %c0_i32 = arith.constant 0 : i32
    %c0_i32_0 = arith.constant 0 : i32
    %c0_i32_1 = arith.constant 0 : i32
    return %c0_i32, %c0_i32_0 : i32, i32
  }
  func.func @transform_4(%arg0: i32) -> (i32, i32) {
    %c0_i32 = arith.constant 0 : i32
    %c0_i32_0 = arith.constant 0 : i32
    %c0_i32_1 = arith.constant 0 : i32
    return %c0_i32, %c0_i32_0 : i32, i32
  }
  func.func @transform_5(%arg0: i32) -> (i32, i32) {
    %c0_i32 = arith.constant 0 : i32
    %c0_i32_0 = arith.constant 0 : i32
    return %arg0, %c0_i32 : i32, i32
  }
}

</mosaic_0001>

<llo_original>
// kernel: tpu_custom_call.1
$region0: #{tpu_custom_call.1}
  #allocation0 [shape = 'u32[]', space=smem, size = 0x4, offset = 0x4, fixed_abs, tag = 'smem constant byte address 0x4 - core index']
  #allocation1 [shape = 'u32[144,128]{1,0:T(1,128)}', space=vmem, size = 0x12000, scoped, tag = 'internal scratch']
  %s0 = inlined_call_operand.hbm [shape: f32[8,128], index: 0, kind: input, shape index: {}]
  %s1 = inlined_call_operand.hbm [shape: f32[128,128], index: 1, kind: input, shape index: {}]
  %s2 = inlined_call_operand.hbm [shape: f32[128,128], index: 2, kind: input, shape index: {}]
  %s3 = inlined_call_operand.hbm [shape: f32[128,128], index: 3, kind: input, shape index: {}]
  %s4 = inlined_call_operand.vmem [shape: f32[3,128], index: 4, kind: input, shape index: {}]
  %s5 = inlined_call_operand.hbm [shape: f32[8,128], index: 5, kind: output, shape index: {}]
  %s6 = sld [smem:[#allocation0]]
  $region46: #{tpu_custom_call.1} parent=0
    _
  %s8 = ssub.s32 1, %s6
  %s9 = scalar_select 0, %s8, %s6
  $region1: #{tpu_custom_call.1} parent=0
    #allocation2 [shape = 'u8[4096]{0}', space=vmem, size = 0x1000, scoped, tag = 'input window, operand 0, single buffered']
    #allocation3 [shape = 's32[1]{0}', space=sflag, size = 0x4, scoped, tag = 'scoped memory for tpu_custom_call.1']
    #allocation4 [shape = 's32[1]{0}', space=sflag, size = 0x4, scoped, tag = 'scoped memory for tpu_custom_call.1']
    #allocation5 [shape = 'u8[65536]{0}', space=vmem, size = 0x10000, scoped, tag = 'input window, operand 1, single buffered']
    #allocation6 [shape = 's32[1]{0}', space=sflag, size = 0x4, scoped, tag = 'scoped memory for tpu_custom_call.1']
    #allocation7 [shape = 'u8[65536]{0}', space=vmem, size = 0x10000, scoped, tag = 'input window, operand 2, single buffered']
    #allocation8 [shape = 'u8[65536]{0}', space=vmem, size = 0x10000, scoped, tag = 'input window, operand 3, single buffered']
    #allocation9 [shape = 's32[1]{0}', space=sflag, size = 0x4, scoped, tag = 'scoped memory for tpu_custom_call.1']
    #allocation10 [shape = 'u8[4096]{0}', space=vmem, size = 0x1000, scoped, tag = 'output window, operand 0, single buffered']
    %10 = vsyncpa [#allocation3], 0
    %11 = vsyncpa [#allocation6], 0
    %12 = vsyncpa [#allocation9], 0
    %13 = vsyncpa [#allocation4], 0
    // Predicated region
    $region2: #{tpu_custom_call.1} parent=1 // pred_check
      _
    $region3: #{tpu_custom_call.1} parent=1 // pred_check_branch
      %15 = sbr.rel (0) target = $region5
    $region4: #{tpu_custom_call.1} parent=1 // pred_region
      %s17 = ssub.s32 128, 128
      %18 = vsyncadd [#allocation3], %s17
      %s20 = sshll.u32 [#allocation2], 4
      %s21 = int_to_ptr.vmem [resolvable:$true] %s20
      %23 = dma.hbm_to_vmem [thread:$0]  %s0, 128, %s21, [#allocation3]
    $region5: #{tpu_custom_call.1} parent=1 // pred_fallthru
      _
    // Predicated region
    $region6: #{tpu_custom_call.1} parent=1 // pred_check
      _
    $region7: #{tpu_custom_call.1} parent=1 // pred_check_branch
      %25 = sbr.rel (0) target = $region9
    $region8: #{tpu_custom_call.1} parent=1 // pred_region
      %s27 = ssub.s32 2048, 2048
      %28 = vsyncadd [#allocation6], %s27
      %s29 = sshll.u32 [#allocation5], 4
      %s30 = int_to_ptr.vmem [resolvable:$true] %s29
      %35 = dma.hbm_to_vmem [thread:$0]  %s1, 2048, %s30, [#allocation6], 128, 128, 8
    $region9: #{tpu_custom_call.1} parent=1 // pred_fallthru
      _
    // Predicated region
    $region10: #{tpu_custom_call.1} parent=1 // pred_check
      _
    $region11: #{tpu_custom_call.1} parent=1 // pred_check_branch
      %37 = sbr.rel (0) target = $region13
    $region12: #{tpu_custom_call.1} parent=1 // pred_region
      %s39 = ssub.s32 2048, 2048
      %40 = vsyncadd [#allocation6], %s39
      %s41 = sshll.u32 [#allocation7], 4
      %s42 = int_to_ptr.vmem [resolvable:$true] %s41
      %47 = dma.hbm_to_vmem [thread:$0]  %s2, 2048, %s42, [#allocation6], 128, 128, 8
    $region13: #{tpu_custom_call.1} parent=1 // pred_fallthru
      _
    // Predicated region
    $region14: #{tpu_custom_call.1} parent=1 // pred_check
      _
    $region15: #{tpu_custom_call.1} parent=1 // pred_check_branch
      %49 = sbr.rel (0) target = $region17
    $region16: #{tpu_custom_call.1} parent=1 // pred_region
      %s51 = ssub.s32 2048, 2048
      %52 = vsyncadd [#allocation9], %s51
      %s53 = sshll.u32 [#allocation8], 4
      %s54 = int_to_ptr.vmem [resolvable:$true] %s53
      %59 = dma.hbm_to_vmem [thread:$0]  %s3, 2048, %s54, [#allocation9], 128, 128, 8
    $region17: #{tpu_custom_call.1} parent=1 // pred_fallthru
      _
    // Predicated region
    $region18: #{tpu_custom_call.1} parent=1 // pred_check
      _
    $region19: #{tpu_custom_call.1} parent=1 // pred_check_branch
      %61 = sbr.rel (0) target = $region21
    $region20: #{tpu_custom_call.1} parent=1 // pred_region
      _
    $region21: #{tpu_custom_call.1} parent=1 // pred_fallthru
      _
    // Predicated region
    $region22: #{tpu_custom_call.1} parent=1 // pred_check
      _
    $region23: #{tpu_custom_call.1} parent=1 // pred_check_branch
      %63 = sbr.rel (0) target = $region25
    $region24: #{tpu_custom_call.1} parent=1 // pred_region
      %64 = dma.done [#allocation3], 128
    $region25: #{tpu_custom_call.1} parent=1 // pred_fallthru
      _
    // Predicated region
    $region26: #{tpu_custom_call.1} parent=1 // pred_check
      _
    $region27: #{tpu_custom_call.1} parent=1 // pred_check_branch
      %66 = sbr.rel (0) target = $region29
    $region28: #{tpu_custom_call.1} parent=1 // pred_region
      %67 = dma.done [#allocation6], 2048
    $region29: #{tpu_custom_call.1} parent=1 // pred_fallthru
      _
    // Predicated region
    $region30: #{tpu_custom_call.1} parent=1 // pred_check
      _
    $region31: #{tpu_custom_call.1} parent=1 // pred_check_branch
      %69 = sbr.rel (0) target = $region33
    $region32: #{tpu_custom_call.1} parent=1 // pred_region
      %70 = dma.done [#allocation6], 2048
    $region33: #{tpu_custom_call.1} parent=1 // pred_fallthru
      _
    // Predicated region
    $region34: #{tpu_custom_call.1} parent=1 // pred_check
      _
    $region35: #{tpu_custom_call.1} parent=1 // pred_check_branch
      %72 = sbr.rel (0) target = $region37
    $region36: #{tpu_custom_call.1} parent=1 // pred_region
      %73 = dma.done [#allocation9], 2048
    $region37: #{tpu_custom_call.1} parent=1 // pred_fallthru
      _
    %v74 = vld [vmem:[#allocation2] sm:$0xff]
    %v75 = vld [vmem:[#allocation5] sm:$0xff]
    %v76 = vld [vmem:[#allocation5 + $0x8] sm:$0xff]
    %v77 = vld [vmem:[#allocation5 + $0x10] sm:$0xff]
    %v78 = vld [vmem:[#allocation5 + $0x18] sm:$0xff]
    %v79 = vld [vmem:[#allocation5 + $0x20] sm:$0xff]
    %v80 = vld [vmem:[#allocation5 + $0x28] sm:$0xff]
    %v81 = vld [vmem:[#allocation5 + $0x30] sm:$0xff]
    %v82 = vld [vmem:[#allocation5 + $0x38] sm:$0xff]
    %v83 = vld [vmem:[#allocation5 + $0x40] sm:$0xff]
    %v84 = vld [vmem:[#allocation5 + $0x48] sm:$0xff]
    %v85 = vld [vmem:[#allocation5 + $0x50] sm:$0xff]
    %v86 = vld [vmem:[#allocation5 + $0x58] sm:$0xff]
    %v87 = vld [vmem:[#allocation5 + $0x60] sm:$0xff]
    %v88 = vld [vmem:[#allocation5 + $0x68] sm:$0xff]
    %v89 = vld [vmem:[#allocation5 + $0x70] sm:$0xff]
    %v90 = vld [vmem:[#allocation5 + $0x78] sm:$0xff]
    %v91 = vld [vmem:[%s4] sm:$0x1]
    %v92 = vlaneseq
    %v93 = vshrl.u32 %v92, 7
    %v94 = vsub.s32 0, %v93
    %v95 = vrot.slane %v91, %v94
    %96 = vmatprep.subr.mxu0 0.0
    %97 = vmatpush1.msra.mxu0 %v75
    %98 = vmatprep.subr.mxu0 0.0
    %99 = vmatpush1.msra.mxu0 %v76
    %100 = vmatprep.subr.mxu0 0.0
    %101 = vmatpush1.msra.mxu0 %v77
    %102 = vmatprep.subr.mxu0 0.0
    %103 = vmatpush1.msra.mxu0 %v78
    %104 = vmatprep.subr.mxu0 0.0
    %105 = vmatpush1.msra.mxu0 %v79
    %106 = vmatprep.subr.mxu0 0.0
    %107 = vmatpush1.msra.mxu0 %v80
    %108 = vmatprep.subr.mxu0 0.0
    %109 = vmatpush1.msra.mxu0 %v81
    %110 = vmatprep.subr.mxu0 0.0
    %111 = vmatpush1.msra.mxu0 %v82
    %112 = vmatprep.subr.mxu0 0.0
    %113 = vmatpush1.msra.mxu0 %v83
    %114 = vmatprep.subr.mxu0 0.0
    %115 = vmatpush1.msra.mxu0 %v84
    %116 = vmatprep.subr.mxu0 0.0
    %117 = vmatpush1.msra.mxu0 %v85
    %118 = vmatprep.subr.mxu0 0.0
    %119 = vmatpush1.msra.mxu0 %v86
    %120 = vmatprep.subr.mxu0 0.0
    %121 = vmatpush1.msra.mxu0 %v87
    %122 = vmatprep.subr.mxu0 0.0
    %123 = vmatpush1.msra.mxu0 %v88
    %124 = vmatprep.subr.mxu0 0.0
    %125 = vmatpush1.msra.mxu0 %v89
    %126 = vmatprep.subr.mxu0 0.0
    %127 = vmatpush1.msra.mxu0 %v90
    %128 = vmatprep.subr.mxu0 0.0
    %129 = vmatpush1.msra.mxu0 0.0
    %130 = vmatprep.subr.mxu0 0.0
    %131 = vmatpush1.msra.mxu0 0.0
    %132 = vmatprep.subr.mxu0 0.0
    %133 = vmatpush1.msra.mxu0 0.0
    %134 = vmatprep.subr.mxu0 0.0
    %135 = vmatpush1.msra.mxu0 0.0
    %136 = vmatprep.subr.mxu0 0.0
    %137 = vmatpush1.msra.mxu0 0.0
    %138 = vmatprep.subr.mxu0 0.0
    %139 = vmatpush1.msra.mxu0 0.0
    %140 = vmatprep.subr.mxu0 0.0
    %141 = vmatpush1.msra.mxu0 0.0
    %142 = vmatprep.subr.mxu0 0.0
    %143 = vmatpush1.msra.mxu0 0.0
    %144 = vmatprep.subr.mxu0 0.0
    %145 = vmatpush1.msra.mxu0 0.0
    %146 = vmatprep.subr.mxu0 0.0
    %147 = vmatpush1.msra.mxu0 0.0
    %148 = vmatprep.subr.mxu0 0.0
    %149 = vmatpush1.msra.mxu0 0.0
    %150 = vmatprep.subr.mxu0 0.0
    %151 = vmatpush1.msra.mxu0 0.0
    %152 = vmatprep.subr.mxu0 0.0
    %153 = vmatpush1.msra.mxu0 0.0
    %154 = vmatprep.subr.mxu0 0.0
    %155 = vmatpush1.msra.mxu0 0.0
    %156 = vmatprep.subr.mxu0 0.0
    %157 = vmatpush1.msra.mxu0 0.0
    %158 = vmatprep.subr.mxu0 0.0
    %159 = vmatpush1.msra.mxu0 0.0
    %160 = vmatprep.mubr.f32.mxu0 0.0
    %161 = vmatmul.mubr.f32.gmra.mrb[0].mxu0 %v74
    %v162 = vpop.f32.mrb[0].mxu0
    %v163 = vadd.f32 %v95, %v162
    %v164 = vpop.f32.mrb[0].mxu0
    %165 = vdwg.mxu0
    %vm166 = vcmp.gt.f32.partialorder %v163, 0.0
    %v167 = vmul.f32 %v163, 0.2
    %v168 = vsel %vm166, %v163, %v167
    %v169 = vld [vmem:[#allocation7] sm:$0xff]
    %v170 = vld [vmem:[#allocation7 + $0x8] sm:$0xff]
    %v171 = vld [vmem:[#allocation7 + $0x10] sm:$0xff]
    %v172 = vld [vmem:[#allocation7 + $0x18] sm:$0xff]
    %v173 = vld [vmem:[#allocation7 + $0x20] sm:$0xff]
    %v174 = vld [vmem:[#allocation7 + $0x28] sm:$0xff]
    %v175 = vld [vmem:[#allocation7 + $0x30] sm:$0xff]
    %v176 = vld [vmem:[#allocation7 + $0x38] sm:$0xff]
    %v177 = vld [vmem:[#allocation7 + $0x40] sm:$0xff]
    %v178 = vld [vmem:[#allocation7 + $0x48] sm:$0xff]
    %v179 = vld [vmem:[#allocation7 + $0x50] sm:$0xff]
    %v180 = vld [vmem:[#allocation7 + $0x58] sm:$0xff]
    %v181 = vld [vmem:[#allocation7 + $0x60] sm:$0xff]
    %v182 = vld [vmem:[#allocation7 + $0x68] sm:$0xff]
    %v183 = vld [vmem:[#allocation7 + $0x70] sm:$0xff]
    %v184 = vld [vmem:[#allocation7 + $0x78] sm:$0xff]
    %v185 = vld [vmem:[%s4 + $0x1] sm:$0x1]
    %v186 = vlaneseq
    %v187 = vshrl.u32 %v186, 7
    %v188 = vsub.s32 0, %v187
    %v189 = vrot.slane %v185, %v188
    %190 = vmatprep.subr.mxu0 0.0
    %191 = vmatpush1.msra.mxu0 %v169
    %192 = vmatprep.subr.mxu0 0.0
    %193 = vmatpush1.msra.mxu0 %v170
    %194 = vmatprep.subr.mxu0 0.0
    %195 = vmatpush1.msra.mxu0 %v171
    %196 = vmatprep.subr.mxu0 0.0
    %197 = vmatpush1.msra.mxu0 %v172
    %198 = vmatprep.subr.mxu0 0.0
    %199 = vmatpush1.msra.mxu0 %v173
    %200 = vmatprep.subr.mxu0 0.0
    %201 = vmatpush1.msra.mxu0 %v174
    %202 = vmatprep.subr.mxu0 0.0
    %203 = vmatpush1.msra.mxu0 %v175
    %204 = vmatprep.subr.mxu0 0.0
    %205 = vmatpush1.msra.mxu0 %v176
    %206 = vmatprep.subr.mxu0 0.0
    %207 = vmatpush1.msra.mxu0 %v177
    %208 = vmatprep.subr.mxu0 0.0
    %209 = vmatpush1.msra.mxu0 %v178
    %210 = vmatprep.subr.mxu0 0.0
    %211 = vmatpush1.msra.mxu0 %v179
    %212 = vmatprep.subr.mxu0 0.0
    %213 = vmatpush1.msra.mxu0 %v180
    %214 = vmatprep.subr.mxu0 0.0
    %215 = vmatpush1.msra.mxu0 %v181
    %216 = vmatprep.subr.mxu0 0.0
    %217 = vmatpush1.msra.mxu0 %v182
    %218 = vmatprep.subr.mxu0 0.0
    %219 = vmatpush1.msra.mxu0 %v183
    %220 = vmatprep.subr.mxu0 0.0
    %221 = vmatpush1.msra.mxu0 %v184
    %222 = vmatprep.subr.mxu0 0.0
    %223 = vmatpush1.msra.mxu0 0.0
    %224 = vmatprep.subr.mxu0 0.0
    %225 = vmatpush1.msra.mxu0 0.0
    %226 = vmatprep.subr.mxu0 0.0
    %227 = vmatpush1.msra.mxu0 0.0
    %228 = vmatprep.subr.mxu0 0.0
    %229 = vmatpush1.msra.mxu0 0.0
    %230 = vmatprep.subr.mxu0 0.0
    %231 = vmatpush1.msra.mxu0 0.0
    %232 = vmatprep.subr.mxu0 0.0
    %233 = vmatpush1.msra.mxu0 0.0
    %234 = vmatprep.subr.mxu0 0.0
    %235 = vmatpush1.msra.mxu0 0.0
    %236 = vmatprep.subr.mxu0 0.0
    %237 = vmatpush1.msra.mxu0 0.0
    %238 = vmatprep.subr.mxu0 0.0
    %239 = vmatpush1.msra.mxu0 0.0
    %240 = vmatprep.subr.mxu0 0.0
    %241 = vmatpush1.msra.mxu0 0.0
    %242 = vmatprep.subr.mxu0 0.0
    %243 = vmatpush1.msra.mxu0 0.0
    %244 = vmatprep.subr.mxu0 0.0
    %245 = vmatpush1.msra.mxu0 0.0
    %246 = vmatprep.subr.mxu0 0.0
    %247 = vmatpush1.msra.mxu0 0.0
    %248 = vmatprep.subr.mxu0 0.0
    %249 = vmatpush1.msra.mxu0 0.0
    %250 = vmatprep.subr.mxu0 0.0
    %251 = vmatpush1.msra.mxu0 0.0
    %252 = vmatprep.subr.mxu0 0.0
    %253 = vmatpush1.msra.mxu0 0.0
    %254 = vmatprep.mubr.f32.mxu0 0.0
    %255 = vmatmul.mubr.f32.gmra.mrb[0].mxu0 %v168
    %v256 = vpop.f32.mrb[0].mxu0
    %v257 = vadd.f32 %v189, %v256
    %v258 = vpop.f32.mrb[0].mxu0
    %259 = vdwg.mxu0
    %vm260 = vcmp.gt.f32.partialorder %v257, 0.0
    %v261 = vmul.f32 %v257, 0.2
    %v262 = vsel %vm260, %v257, %v261
    %v263 = vld [vmem:[#allocation8] sm:$0xff]
    %v264 = vld [vmem:[#allocation8 + $0x8] sm:$0xff]
    %v265 = vld [vmem:[#allocation8 + $0x10] sm:$0xff]
    %v266 = vld [vmem:[#allocation8 + $0x18] sm:$0xff]
    %v267 = vld [vmem:[#allocation8 + $0x20] sm:$0xff]
    %v268 = vld [vmem:[#allocation8 + $0x28] sm:$0xff]
    %v269 = vld [vmem:[#allocation8 + $0x30] sm:$0xff]
    %v270 = vld [vmem:[#allocation8 + $0x38] sm:$0xff]
    %v271 = vld [vmem:[#allocation8 + $0x40] sm:$0xff]
    %v272 = vld [vmem:[#allocation8 + $0x48] sm:$0xff]
    %v273 = vld [vmem:[#allocation8 + $0x50] sm:$0xff]
    %v274 = vld [vmem:[#allocation8 + $0x58] sm:$0xff]
    %v275 = vld [vmem:[#allocation8 + $0x60] sm:$0xff]
    %v276 = vld [vmem:[#allocation8 + $0x68] sm:$0xff]
    %v277 = vld [vmem:[#allocation8 + $0x70] sm:$0xff]
    %v278 = vld [vmem:[#allocation8 + $0x78] sm:$0xff]
    %v279 = vld [vmem:[%s4 + $0x2] sm:$0x1]
    %v280 = vlaneseq
    %v281 = vshrl.u32 %v280, 7
    %v282 = vsub.s32 0, %v281
    %v283 = vrot.slane %v279, %v282
    %284 = vmatprep.subr.mxu0 0.0
    %285 = vmatpush1.msra.mxu0 %v263
    %286 = vmatprep.subr.mxu0 0.0
    %287 = vmatpush1.msra.mxu0 %v264
    %288 = vmatprep.subr.mxu0 0.0
    %289 = vmatpush1.msra.mxu0 %v265
    %290 = vmatprep.subr.mxu0 0.0
    %291 = vmatpush1.msra.mxu0 %v266
    %292 = vmatprep.subr.mxu0 0.0
    %293 = vmatpush1.msra.mxu0 %v267
    %294 = vmatprep.subr.mxu0 0.0
    %295 = vmatpush1.msra.mxu0 %v268
    %296 = vmatprep.subr.mxu0 0.0
    %297 = vmatpush1.msra.mxu0 %v269
    %298 = vmatprep.subr.mxu0 0.0
    %299 = vmatpush1.msra.mxu0 %v270
    %300 = vmatprep.subr.mxu0 0.0
    %301 = vmatpush1.msra.mxu0 %v271
    %302 = vmatprep.subr.mxu0 0.0
    %303 = vmatpush1.msra.mxu0 %v272
    %304 = vmatprep.subr.mxu0 0.0
    %305 = vmatpush1.msra.mxu0 %v273
    %306 = vmatprep.subr.mxu0 0.0
    %307 = vmatpush1.msra.mxu0 %v274
    %308 = vmatprep.subr.mxu0 0.0
    %309 = vmatpush1.msra.mxu0 %v275
    %310 = vmatprep.subr.mxu0 0.0
    %311 = vmatpush1.msra.mxu0 %v276
    %312 = vmatprep.subr.mxu0 0.0
    %313 = vmatpush1.msra.mxu0 %v277
    %314 = vmatprep.subr.mxu0 0.0
    %315 = vmatpush1.msra.mxu0 %v278
    %316 = vmatprep.subr.mxu0 0.0
    %317 = vmatpush1.msra.mxu0 0.0
    %318 = vmatprep.subr.mxu0 0.0
    %319 = vmatpush1.msra.mxu0 0.0
    %320 = vmatprep.subr.mxu0 0.0
    %321 = vmatpush1.msra.mxu0 0.0
    %322 = vmatprep.subr.mxu0 0.0
    %323 = vmatpush1.msra.mxu0 0.0
    %324 = vmatprep.subr.mxu0 0.0
    %325 = vmatpush1.msra.mxu0 0.0
    %326 = vmatprep.subr.mxu0 0.0
    %327 = vmatpush1.msra.mxu0 0.0
    %328 = vmatprep.subr.mxu0 0.0
    %329 = vmatpush1.msra.mxu0 0.0
    %330 = vmatprep.subr.mxu0 0.0
    %331 = vmatpush1.msra.mxu0 0.0
    %332 = vmatprep.subr.mxu0 0.0
    %333 = vmatpush1.msra.mxu0 0.0
    %334 = vmatprep.subr.mxu0 0.0
    %335 = vmatpush1.msra.mxu0 0.0
    %336 = vmatprep.subr.mxu0 0.0
    %337 = vmatpush1.msra.mxu0 0.0
    %338 = vmatprep.subr.mxu0 0.0
    %339 = vmatpush1.msra.mxu0 0.0
    %340 = vmatprep.subr.mxu0 0.0
    %341 = vmatpush1.msra.mxu0 0.0
    %342 = vmatprep.subr.mxu0 0.0
    %343 = vmatpush1.msra.mxu0 0.0
    %344 = vmatprep.subr.mxu0 0.0
    %345 = vmatpush1.msra.mxu0 0.0
    %346 = vmatprep.subr.mxu0 0.0
    %347 = vmatpush1.msra.mxu0 0.0
    %348 = vmatprep.mubr.f32.mxu0 0.0
    %349 = vmatmul.mubr.f32.gmra.mrb[0].mxu0 %v262
    %v350 = vpop.f32.mrb[0].mxu0
    %v351 = vadd.f32 %v283, %v350
    %v352 = vpop.f32.mrb[0].mxu0
    %353 = vdwg.mxu0
    %354 = vst [vmem:[#allocation10] sm:$0xff] %v351
    // Predicated region
    $region38: #{tpu_custom_call.1} parent=1 // pred_check
      _
    $region39: #{tpu_custom_call.1} parent=1 // pred_check_branch
      %356 = sbr.rel (0) target = $region41
    $region40: #{tpu_custom_call.1} parent=1 // pred_region
      %s358 = ssub.s32 128, 128
      %359 = vsyncadd [#allocation4], %s358
      %s361 = sshll.u32 [#allocation10], 4
      %s362 = int_to_ptr.vmem [resolvable:$true] %s361
      %364 = dma.vmem_to_hbm [thread:$0]  %s362, 128, %s5, [#allocation4]
    $region41: #{tpu_custom_call.1} parent=1 // pred_fallthru
      _
    // Predicated region
    $region42: #{tpu_custom_call.1} parent=1 // pred_check
      _
    $region43: #{tpu_custom_call.1} parent=1 // pred_check_branch
      %366 = sbr.rel (0) target = $region45
    $region44: #{tpu_custom_call.1} parent=1 // pred_region
      %367 = dma.done [#allocation4], 128
    $region45: #{tpu_custom_call.1} parent=1 // pred_fallthru
      _
    %368 = vsyncpa [#allocation3], 1
    %369 = vsyncpa [#allocation6], 1
    %370 = vsyncpa [#allocation9], 1
    %371 = vsyncpa [#allocation4], 1

</llo_original>
